<compile_context>
chip_gen: v7x
topology: tpu7x:2x2x1
jax: 0.10.0
libtpu: 0.0.40
codegen_flags: <defaults>
</compile_context>

<pallas_src>
import functools

import jax
import jax.numpy as jnp
from jax.experimental import pallas as pl
from jax.experimental.pallas import tpu as pltpu

H1 = 128   # 100 padded to one 128-lane tile
H2 = 256   # 200 padded to two 128-lane tiles


def _round_up(x, m):
    return (x + m - 1) // m * m


def mlp_widen_kernel(x_ref,
                     w1_ref, b1_ref,
                     w2_ref, b2_ref,
                     w3_ref, b3_ref,
                     w4_ref, b4_ref,
                     o_ref):
    x = x_ref[...]                                            # (TILE_B, 1) f32

    # layer 1: 1 -> 128.  Contraction dim is 1, so skip the MXU entirely and
    # use a VPU broadcast multiply (elementwise slot is otherwise idle).
    h1 = jnp.maximum(x * w1_ref[...] + b1_ref[...], 0.0)      # (TILE_B, 128)

    # layer 2: 128 -> 256 on the MXU.  Operands may be bf16 (wrapper choice);
    # accumulation and everything elementwise stays f32.
    h2 = jnp.dot(h1.astype(w2_ref.dtype), w2_ref[...],
                 preferred_element_type=jnp.float32)
    h2 = jnp.maximum(h2 + b2_ref[...], 0.0)                   # (TILE_B, 256)

    # layer 3: 256 -> 128 on the MXU.
    h3 = jnp.dot(h2.astype(w3_ref.dtype), w3_ref[...],
                 preferred_element_type=jnp.float32)
    h3 = jnp.maximum(h3 + b3_ref[...], 0.0)                   # (TILE_B, 128)

    # layer 4: 128 -> 1.  Contract the w4 row against h3's lane axis so the
    # result is a lane-dense (1, TILE_B) row (unmasked vst) instead of a
    # (TILE_B, 1) column of masked partial stores.
    logits = jax.lax.dot_general(
        w4_ref[...], h3,
        dimension_numbers=(((1,), (1,)), ((), ())),
        preferred_element_type=jnp.float32)                   # (1, TILE_B)
    o_ref[...] = jax.nn.sigmoid(logits + b4_ref[...]).astype(o_ref.dtype)


@functools.partial(jax.jit, static_argnames=("tile_b", "use_bf16"))
def mlp_widen_forward(x, params, *, tile_b=1024, use_bf16=True):
    """x: (B, 1). params: w1..w4 as (in, out), b1..b4 as (1, out). Returns (B, 1)."""
    B = x.shape[0]
    f32 = jnp.float32

    # ---- pad params to lane multiples (zeros keep the math exact) ----------
    w1 = jnp.pad(params["w1"].astype(f32), ((0, 0), (0, H1 - 100)))          # (1, 128)
    b1 = jnp.pad(params["b1"].astype(f32), ((0, 0), (0, H1 - 100)))          # (1, 128)
    w2 = jnp.pad(params["w2"].astype(f32), ((0, H1 - 100), (0, H2 - 200)))   # (128, 256)
    b2 = jnp.pad(params["b2"].astype(f32), ((0, 0), (0, H2 - 200)))          # (1, 256)
    w3 = jnp.pad(params["w3"].astype(f32), ((0, H2 - 200), (0, H1 - 100)))   # (256, 128)
    b3 = jnp.pad(params["b3"].astype(f32), ((0, 0), (0, H1 - 100)))          # (1, 128)
    w4 = jnp.pad(params["w4"].astype(f32).T, ((0, 0), (0, H1 - 100)))        # (1, 128) row
    b4 = params["b4"].astype(f32).reshape(1, 1)                              # (1, 1)
    if use_bf16:
        # bf16 operands for the two large matmuls (f32 accumulation in-kernel);
        # halves the resident weight footprint and MXU passes on v6e/v7x.
        w2 = w2.astype(jnp.bfloat16)
        w3 = w3.astype(jnp.bfloat16)

    # ---- batch tiling -------------------------------------------------------
    if _round_up(B, 8) <= tile_b:
        tile_b = _round_up(B, 8)          # single tile: block == full array
    else:
        tile_b = _round_up(tile_b, 128)   # multi-tile: lane-dense output blocks
    n_tiles = pl.cdiv(B, tile_b)
    b_pad = n_tiles * tile_b
    x_pad = jnp.pad(x.astype(f32), ((0, b_pad - B), (0, 0)))                 # (B_pad, 1)

    def const_spec(shape):
        return pl.BlockSpec(shape, lambda i: (0,) * len(shape))

    in_specs = [
        pl.BlockSpec((tile_b, 1), lambda i: (i, 0)),   # x: tiled over batch
        const_spec((1, H1)), const_spec((1, H1)),      # w1, b1 (VMEM-resident)
        const_spec((H1, H2)), const_spec((1, H2)),     # w2, b2
        const_spec((H2, H1)), const_spec((1, H1)),     # w3, b3
        const_spec((1, H1)), const_spec((1, 1)),       # w4 row, b4
    ]
    out_specs = pl.BlockSpec((1, tile_b), lambda i: (0, i))   # lane-dense output slab

    out_row = pl.pallas_call(
        mlp_widen_kernel,
        out_shape=jax.ShapeDtypeStruct((1, b_pad), jnp.float32),
        grid=(n_tiles,),
        in_specs=in_specs,
        out_specs=out_specs,
        compiler_params=pltpu.CompilerParams(
            dimension_semantics=("parallel",),          # batch tiles -> both TCs on v7x
            vmem_limit_bytes=32 * 1024 * 1024,          # safe on v5e/v6e/v7x
        ),
    )(x_pad, w1, b1, w2, b2, w3, b3, w4, b4)

    # strip padded tail rows and restore (B, 1)
    return out_row[0, :B].reshape(B, 1)


def init_params(key):
    """nn.Linear-style init U(-1/sqrt(fan_in), 1/sqrt(fan_in)).
    Weights stored as (in, out) = PyTorch weight transposed; biases as (1, out)."""
    dims = [(1, 100), (100, 200), (200, 100), (100, 1)]
    params = {}
    for i, (fan_in, fan_out) in enumerate(dims, start=1):
        key, kw, kb = jax.random.split(key, 3)
        bound = 1.0 / (fan_in ** 0.5)
        params[f"w{i}"] = jax.random.uniform(
            kw, (fan_in, fan_out), jnp.float32, minval=-bound, maxval=bound)
        params[f"b{i}"] = jax.random.uniform(
            kb, (1, fan_out), jnp.float32, minval=-bound, maxval=bound)
    return params


def reference_forward(x, p):
    h = jnp.maximum(x @ p["w1"] + p["b1"], 0.0)
    h = jnp.maximum(h @ p["w2"] + p["b2"], 0.0)
    h = jnp.maximum(h @ p["w3"] + p["b3"], 0.0)
    return jax.nn.sigmoid(h @ p["w4"] + p["b4"])


if __name__ == "__main__":
    key = jax.random.PRNGKey(0)
    key, kx1, kx2 = jax.random.split(key, 3)
    params = init_params(key)

    # Small single-tile case (B=8).
    B = 8
    x = jax.random.normal(kx1, (B, 1), jnp.float32)
    ref = reference_forward(x, params)

    out_bf16 = jax.block_until_ready(mlp_widen_forward(x, params))           # bf16 matmuls
    assert out_bf16.shape == (B, 1)
    # bf16 MXU operands (f32 accumulation): intentionally relaxed tolerance.
    assert jnp.allclose(out_bf16, ref, atol=2e-2, rtol=2e-2)

    out_f32 = jax.block_until_ready(mlp_widen_forward(x, params, use_bf16=False))
    assert jnp.allclose(out_f32, ref, atol=1e-5, rtol=1e-5)

    # Multi-tile case with a ragged tail (exercises grid + tail slicing).
    B2 = 300
    x2 = jax.random.normal(kx2, (B2, 1), jnp.float32)
    ref2 = reference_forward(x2, params)
    out2 = jax.block_until_ready(mlp_widen_forward(x2, params, tile_b=128))
    assert out2.shape == (B2, 1)
    assert jnp.allclose(out2, ref2, atol=2e-2, rtol=2e-2)

    print("KERNEL_OK")
</pallas_src>

<mosaic_0001>
module attributes {stable_mosaic.version = 11 : i64} {
  func.func @mlp_widen_kernel(%arg0: i32, %arg1: memref<8x1xf32, #tpu.memory_space<vmem>>, %arg2: memref<1x128xf32, #tpu.memory_space<vmem>>, %arg3: memref<1x128xf32, #tpu.memory_space<vmem>>, %arg4: memref<128x256xbf16, #tpu.memory_space<vmem>>, %arg5: memref<1x256xf32, #tpu.memory_space<vmem>>, %arg6: memref<256x128xbf16, #tpu.memory_space<vmem>>, %arg7: memref<1x128xf32, #tpu.memory_space<vmem>>, %arg8: memref<1x128xf32, #tpu.memory_space<vmem>>, %arg9: memref<1x1xf32, #tpu.memory_space<vmem>>, %arg10: memref<1x8xf32, #tpu.memory_space<vmem>>) attributes {dimension_semantics = [#tpu.dimension_semantics<parallel>], iteration_bounds = array<i64: 1>, scalar_prefetch = 0 : i64, scratch_operands = 0 : i64, tpu.core_type = #tpu.core_type<tc>, window_params = [{transform_indices = @transform_0, window_bounds = array<i64: 8, 1>}, {pipeline_mode = #tpu.pipeline_mode<synchronous>, transform_indices = @transform_1, window_bounds = array<i64: 1, 128>}, {pipeline_mode = #tpu.pipeline_mode<synchronous>, transform_indices = @transform_2, window_bounds = array<i64: 1, 128>}, {pipeline_mode = #tpu.pipeline_mode<synchronous>, transform_indices = @transform_3, window_bounds = array<i64: 128, 256>}, {pipeline_mode = #tpu.pipeline_mode<synchronous>, transform_indices = @transform_4, window_bounds = array<i64: 1, 256>}, {pipeline_mode = #tpu.pipeline_mode<synchronous>, transform_indices = @transform_5, window_bounds = array<i64: 256, 128>}, {pipeline_mode = #tpu.pipeline_mode<synchronous>, transform_indices = @transform_6, window_bounds = array<i64: 1, 128>}, {pipeline_mode = #tpu.pipeline_mode<synchronous>, transform_indices = @transform_7, window_bounds = array<i64: 1, 128>}, {pipeline_mode = #tpu.pipeline_mode<synchronous>, transform_indices = @transform_8, window_bounds = array<i64: 1, 1>}, {transform_indices = @transform_9, window_bounds = array<i64: 1, 8>}]} {
    %c0 = arith.constant 0 : index
    %c0_0 = arith.constant 0 : index
    %0 = vector.load %arg1[%c0, %c0_0] : memref<8x1xf32, #tpu.memory_space<vmem>>, vector<8x1xf32>
    %c0_1 = arith.constant 0 : index
    %c0_2 = arith.constant 0 : index
    %1 = vector.load %arg2[%c0_1, %c0_2] : memref<1x128xf32, #tpu.memory_space<vmem>>, vector<1x128xf32>
    %2 = vector.broadcast %0 : vector<8x1xf32> to vector<8x128xf32>
    %3 = vector.broadcast %1 : vector<1x128xf32> to vector<8x128xf32>
    %4 = arith.mulf %2, %3 : vector<8x128xf32>
    %c0_3 = arith.constant 0 : index
    %c0_4 = arith.constant 0 : index
    %5 = vector.load %arg3[%c0_3, %c0_4] : memref<1x128xf32, #tpu.memory_space<vmem>>, vector<1x128xf32>
    %6 = vector.broadcast %5 : vector<1x128xf32> to vector<8x128xf32>
    %7 = arith.addf %4, %6 : vector<8x128xf32>
    %cst = arith.constant 0.000000e+00 : f32
    %8 = vector.broadcast %cst : f32 to vector<8x128xf32>
    %9 = arith.maximumf %7, %8 : vector<8x128xf32>
    %10 = arith.truncf %9 : vector<8x128xf32> to vector<8x128xbf16>
    %c0_5 = arith.constant 0 : index
    %c0_6 = arith.constant 0 : index
    %11 = vector.load %arg4[%c0_5, %c0_6] : memref<128x256xbf16, #tpu.memory_space<vmem>>, vector<128x256xbf16>
    %cst_7 = arith.constant dense<0.000000e+00> : vector<8x256xf32>
    %12 = tpu.matmul %10, %11, %cst_7 {dimension_numbers = #tpu.dot_dimension_numbers<[1], [0], [0], [1], [0, 0, 1, 1], [], []>} : vector<8x128xbf16>, vector<128x256xbf16>, vector<8x256xf32> -> vector<8x256xf32>
    %c0_8 = arith.constant 0 : index
    %c0_9 = arith.constant 0 : index
    %13 = vector.load %arg5[%c0_8, %c0_9] : memref<1x256xf32, #tpu.memory_space<vmem>>, vector<1x256xf32>
    %14 = vector.broadcast %13 : vector<1x256xf32> to vector<8x256xf32>
    %15 = arith.addf %12, %14 : vector<8x256xf32>
    %cst_10 = arith.constant 0.000000e+00 : f32
    %16 = vector.broadcast %cst_10 : f32 to vector<8x256xf32>
    %17 = arith.maximumf %15, %16 : vector<8x256xf32>
    %18 = arith.truncf %17 : vector<8x256xf32> to vector<8x256xbf16>
    %c0_11 = arith.constant 0 : index
    %c0_12 = arith.constant 0 : index
    %19 = vector.load %arg6[%c0_11, %c0_12] : memref<256x128xbf16, #tpu.memory_space<vmem>>, vector<256x128xbf16>
    %cst_13 = arith.constant dense<0.000000e+00> : vector<8x128xf32>
    %20 = tpu.matmul %18, %19, %cst_13 {dimension_numbers = #tpu.dot_dimension_numbers<[1], [0], [0], [1], [0, 0, 1, 1], [], []>} : vector<8x256xbf16>, vector<256x128xbf16>, vector<8x128xf32> -> vector<8x128xf32>
    %c0_14 = arith.constant 0 : index
    %c0_15 = arith.constant 0 : index
    %21 = vector.load %arg7[%c0_14, %c0_15] : memref<1x128xf32, #tpu.memory_space<vmem>>, vector<1x128xf32>
    %22 = vector.broadcast %21 : vector<1x128xf32> to vector<8x128xf32>
    %23 = arith.addf %20, %22 : vector<8x128xf32>
    %cst_16 = arith.constant 0.000000e+00 : f32
    %24 = vector.broadcast %cst_16 : f32 to vector<8x128xf32>
    %25 = arith.maximumf %23, %24 : vector<8x128xf32>
    %c0_17 = arith.constant 0 : index
    %c0_18 = arith.constant 0 : index
    %26 = vector.load %arg8[%c0_17, %c0_18] : memref<1x128xf32, #tpu.memory_space<vmem>>, vector<1x128xf32>
    %cst_19 = arith.constant dense<0.000000e+00> : vector<1x8xf32>
    %27 = tpu.matmul %26, %25, %cst_19 {dimension_numbers = #tpu.dot_dimension_numbers<[1], [1], [0], [0], [0, 0, 1, 0], [], []>} : vector<1x128xf32>, vector<8x128xf32>, vector<1x8xf32> -> vector<1x8xf32>
    %c0_20 = arith.constant 0 : index
    %c0_21 = arith.constant 0 : index
    %28 = vector.load %arg9[%c0_20, %c0_21] : memref<1x1xf32, #tpu.memory_space<vmem>>, vector<1x1xf32>
    %29 = vector.broadcast %28 : vector<1x1xf32> to vector<1x8xf32>
    %30 = arith.addf %27, %29 : vector<1x8xf32>
    %31 = arith.negf %30 : vector<1x8xf32>
    %32 = math.exp %31 : vector<1x8xf32>
    %cst_22 = arith.constant 1.000000e+00 : f32
    %33 = vector.broadcast %cst_22 : f32 to vector<1x8xf32>
    %34 = arith.addf %33, %32 : vector<1x8xf32>
    %35 = arith.divf %33, %34 : vector<1x8xf32>
    %c0_23 = arith.constant 0 : index
    %c0_24 = arith.constant 0 : index
    %36 = vector.load %arg10[%c0_23, %c0_24] : memref<1x8xf32, #tpu.memory_space<vmem>>, vector<1x8xf32>
    tpu.vector_store %arg10[%c0_23, %c0_24], %35 {strides = array<i32>} : memref<1x8xf32, #tpu.memory_space<vmem>>, vector<1x8xf32>,
    return
  }
  func.func @transform_0(%arg0: i32) -> (i32, i32) {
    %c0_i32 = arith.constant 0 : i32
    %c0_i32_0 = arith.constant 0 : i32
    return %arg0, %c0_i32 : i32, i32
  }
  func.func @transform_1(%arg0: i32) -> (i32, i32) {
    %c0_i32 = arith.constant 0 : i32
    %c0_i32_0 = arith.constant 0 : i32
    %c0_i32_1 = arith.constant 0 : i32
    return %c0_i32, %c0_i32_0 : i32, i32
  }
  func.func @transform_2(%arg0: i32) -> (i32, i32) {
    %c0_i32 = arith.constant 0 : i32
    %c0_i32_0 = arith.constant 0 : i32
    %c0_i32_1 = arith.constant 0 : i32
    return %c0_i32, %c0_i32_0 : i32, i32
  }
  func.func @transform_3(%arg0: i32) -> (i32, i32) {
    %c0_i32 = arith.constant 0 : i32
    %c0_i32_0 = arith.constant 0 : i32
    %c0_i32_1 = arith.constant 0 : i32
    return %c0_i32, %c0_i32_0 : i32, i32
  }
  func.func @transform_4(%arg0: i32) -> (i32, i32) {
    %c0_i32 = arith.constant 0 : i32
    %c0_i32_0 = arith.constant 0 : i32
    %c0_i32_1 = arith.constant 0 : i32
    return %c0_i32, %c0_i32_0 : i32, i32
  }
  func.func @transform_5(%arg0: i32) -> (i32, i32) {
    %c0_i32 = arith.constant 0 : i32
    %c0_i32_0 = arith.constant 0 : i32
    %c0_i32_1 = arith.constant 0 : i32
    return %c0_i32, %c0_i32_0 : i32, i32
  }
  func.func @transform_6(%arg0: i32) -> (i32, i32) {
    %c0_i32 = arith.constant 0 : i32
    %c0_i32_0 = arith.constant 0 : i32
    %c0_i32_1 = arith.constant 0 : i32
    return %c0_i32, %c0_i32_0 : i32, i32
  }
  func.func @transform_7(%arg0: i32) -> (i32, i32) {
    %c0_i32 = arith.constant 0 : i32
    %c0_i32_0 = arith.constant 0 : i32
    %c0_i32_1 = arith.constant 0 : i32
    return %c0_i32, %c0_i32_0 : i32, i32
  }
  func.func @transform_8(%arg0: i32) -> (i32, i32) {
    %c0_i32 = arith.constant 0 : i32
    %c0_i32_0 = arith.constant 0 : i32
    %c0_i32_1 = arith.constant 0 : i32
    return %c0_i32, %c0_i32_0 : i32, i32
  }
  func.func @transform_9(%arg0: i32) -> (i32, i32) {
    %c0_i32 = arith.constant 0 : i32
    %c0_i32_0 = arith.constant 0 : i32
    return %c0_i32, %arg0 : i32, i32
  }
}

</mosaic_0001>

<llo_original>
// kernel: mlp_widen_forward.1
$region0: #{mlp_widen_forward.1}
  #allocation0 [shape = 'u32[]', space=smem, size = 0x4, offset = 0x4, fixed_abs, tag = 'smem constant byte address 0x4 - core index']
  #allocation1 [shape = 'u32[144,128]{1,0:T(1,128)}', space=vmem, size = 0x12000, scoped, tag = 'internal scratch']
  #allocation2 [shape = 'f32[1,1]{1,0:T(1,128)S(1)}', space=vmem, size = 0x200, scoped, tag = 'scoped memory for mlp_widen_forward.1']
  %s0 = inlined_call_operand.vmem [shape: f32[8,1], index: 0, kind: input, shape index: {}]
  %s1 = inlined_call_operand.vmem [shape: f32[1,128], index: 1, kind: input, shape index: {}]
  %s2 = inlined_call_operand.vmem [shape: f32[1,128], index: 2, kind: input, shape index: {}]
  %s3 = inlined_call_operand.vmem [shape: bf16[128,256], index: 3, kind: input, shape index: {}]
  %s4 = inlined_call_operand.vmem [shape: f32[1,256], index: 4, kind: input, shape index: {}]
  %s5 = inlined_call_operand.vmem [shape: bf16[256,128], index: 5, kind: input, shape index: {}]
  %s6 = inlined_call_operand.vmem [shape: f32[1,128], index: 6, kind: input, shape index: {}]
  %s7 = inlined_call_operand.vmem [shape: f32[1,128], index: 7, kind: input, shape index: {}]
  %s8 = inlined_call_operand.<no memory space> [shape: f32[1,1], index: 8, kind: input, shape index: {}]
  %s9 = inlined_call_operand.hbm [shape: f32[1,8], index: 9, kind: output, shape index: {}]
  %s10 = sld [smem:[#allocation0]]
  $region46: #{mlp_widen_forward.1} parent=0
    _
  %s12 = ssub.s32 1, %s10
  %s13 = scalar_select 0, %s12, %s10
  %v14 = vstv %s8
  %15 = vst [vmem:[#allocation2] sm:$0x1] %v14
  $region1: #{mlp_widen_forward.1} parent=0
    #allocation3 [shape = 'u8[512]{0}', space=vmem, size = 0x400, scoped, tag = 'output window, operand 0, single buffered']
    #allocation4 [shape = 's32[1]{0}', space=sflag, size = 0x4, scoped, tag = 'scoped memory for mlp_widen_forward.1']
    %16 = vsyncpa [#allocation4], 0
    // Predicated region
    $region2: #{mlp_widen_forward.1} parent=1 // pred_check
      _
    $region3: #{mlp_widen_forward.1} parent=1 // pred_check_branch
      %18 = sbr.rel (0) target = $region5
    $region4: #{mlp_widen_forward.1} parent=1 // pred_region
      _
    $region5: #{mlp_widen_forward.1} parent=1 // pred_fallthru
      _
    // Predicated region
    $region6: #{mlp_widen_forward.1} parent=1 // pred_check
      _
    $region7: #{mlp_widen_forward.1} parent=1 // pred_check_branch
      %20 = sbr.rel (0) target = $region9
    $region8: #{mlp_widen_forward.1} parent=1 // pred_region
      _
    $region9: #{mlp_widen_forward.1} parent=1 // pred_fallthru
      _
    // Predicated region
    $region10: #{mlp_widen_forward.1} parent=1 // pred_check
      _
    $region11: #{mlp_widen_forward.1} parent=1 // pred_check_branch
      %22 = sbr.rel (0) target = $region13
    $region12: #{mlp_widen_forward.1} parent=1 // pred_region
      _
    $region13: #{mlp_widen_forward.1} parent=1 // pred_fallthru
      _
    // Predicated region
    $region14: #{mlp_widen_forward.1} parent=1 // pred_check
      _
    $region15: #{mlp_widen_forward.1} parent=1 // pred_check_branch
      %24 = sbr.rel (0) target = $region17
    $region16: #{mlp_widen_forward.1} parent=1 // pred_region
      _
    $region17: #{mlp_widen_forward.1} parent=1 // pred_fallthru
      _
    // Predicated region
    $region18: #{mlp_widen_forward.1} parent=1 // pred_check
      _
    $region19: #{mlp_widen_forward.1} parent=1 // pred_check_branch
      %26 = sbr.rel (0) target = $region21
    $region20: #{mlp_widen_forward.1} parent=1 // pred_region
      _
    $region21: #{mlp_widen_forward.1} parent=1 // pred_fallthru
      _
    // Predicated region
    $region22: #{mlp_widen_forward.1} parent=1 // pred_check
      _
    $region23: #{mlp_widen_forward.1} parent=1 // pred_check_branch
      %28 = sbr.rel (0) target = $region25
    $region24: #{mlp_widen_forward.1} parent=1 // pred_region
      _
    $region25: #{mlp_widen_forward.1} parent=1 // pred_fallthru
      _
    // Predicated region
    $region26: #{mlp_widen_forward.1} parent=1 // pred_check
      _
    $region27: #{mlp_widen_forward.1} parent=1 // pred_check_branch
      %30 = sbr.rel (0) target = $region29
    $region28: #{mlp_widen_forward.1} parent=1 // pred_region
      _
    $region29: #{mlp_widen_forward.1} parent=1 // pred_fallthru
      _
    // Predicated region
    $region30: #{mlp_widen_forward.1} parent=1 // pred_check
      _
    $region31: #{mlp_widen_forward.1} parent=1 // pred_check_branch
      %32 = sbr.rel (0) target = $region33
    $region32: #{mlp_widen_forward.1} parent=1 // pred_region
      _
    $region33: #{mlp_widen_forward.1} parent=1 // pred_fallthru
      _
    // Predicated region
    $region34: #{mlp_widen_forward.1} parent=1 // pred_check
      _
    $region35: #{mlp_widen_forward.1} parent=1 // pred_check_branch
      %34 = sbr.rel (0) target = $region37
    $region36: #{mlp_widen_forward.1} parent=1 // pred_region
      _
    $region37: #{mlp_widen_forward.1} parent=1 // pred_fallthru
      _
    %v36 = vld [vmem:[%s0] sm:$0xff]
    %v37 = vld [vmem:[%s1] sm:$0x1]
    %39 = vset.pattern.permute.xlu0 0
    %40 = vperm.xlu0 %39, %v36
    %v41 = vpop.permute.xlu0 %40
    %v44 = vlaneseq
    %v45 = vshrl.u32 %v44, 7
    %v46 = vsub.s32 0, %v45
    %v47 = vrot.slane %v37, %v46
    %v49 = vmul.f32 %v41, %v47
    %v50 = vld [vmem:[%s2] sm:$0x1]
    %v52 = vlaneseq
    %v53 = vshrl.u32 %v52, 7
    %v54 = vsub.s32 0, %v53
    %v55 = vrot.slane %v50, %v54
    %v57 = vadd.f32 %v49, %v55
    %v58 = vmax.f32 %v57, 0.0
    %v59 = vpack.c.bf16 %v58, %v58
    %v60 = vld [vmem:[%s3] sm:$0xff]
    %v61 = vld [vmem:[%s3 + $0x8] sm:$0xff]
    %v62 = vld [vmem:[%s3 + $0x10] sm:$0xff]
    %v63 = vld [vmem:[%s3 + $0x18] sm:$0xff]
    %v64 = vld [vmem:[%s3 + $0x20] sm:$0xff]
    %v65 = vld [vmem:[%s3 + $0x28] sm:$0xff]
    %v66 = vld [vmem:[%s3 + $0x30] sm:$0xff]
    %v67 = vld [vmem:[%s3 + $0x38] sm:$0xff]
    %v68 = vld [vmem:[%s3 + $0x40] sm:$0xff]
    %v69 = vld [vmem:[%s3 + $0x48] sm:$0xff]
    %v70 = vld [vmem:[%s3 + $0x50] sm:$0xff]
    %v71 = vld [vmem:[%s3 + $0x58] sm:$0xff]
    %v72 = vld [vmem:[%s3 + $0x60] sm:$0xff]
    %v73 = vld [vmem:[%s3 + $0x68] sm:$0xff]
    %v74 = vld [vmem:[%s3 + $0x70] sm:$0xff]
    %v75 = vld [vmem:[%s3 + $0x78] sm:$0xff]
    %v76 = vld [vmem:[%s4] sm:$0x3]
    %v78 = vlaneseq
    %v79 = vshrl.u32 %v78, 7
    %v80 = vsub.s32 0, %v79
    %v81 = vrot.slane %v76, %v80
    %v82 = vlaneseq
    %v83 = vshrl.u32 %v82, 7
    %v84 = vsub.s32 1, %v83
    %v85 = vrot.slane %v76, %v84
    %v104 = vunpack.c.l.b16 %v60
    %v105 = vunpack.c.h.b16 %v60
    %v106 = vunpack.c.l.b16 %v61
    %v107 = vunpack.c.h.b16 %v61
    %v108 = vunpack.c.l.b16 %v62
    %v109 = vunpack.c.h.b16 %v62
    %v110 = vunpack.c.l.b16 %v63
    %v111 = vunpack.c.h.b16 %v63
    %v112 = vunpack.c.l.b16 %v64
    %v113 = vunpack.c.h.b16 %v64
    %v114 = vunpack.c.l.b16 %v65
    %v115 = vunpack.c.h.b16 %v65
    %v116 = vunpack.c.l.b16 %v66
    %v117 = vunpack.c.h.b16 %v66
    %v118 = vunpack.c.l.b16 %v67
    %v119 = vunpack.c.h.b16 %v67
    %v120 = vunpack.c.l.b16 %v68
    %v121 = vunpack.c.h.b16 %v68
    %v122 = vunpack.c.l.b16 %v69
    %v123 = vunpack.c.h.b16 %v69
    %v124 = vunpack.c.l.b16 %v70
    %v125 = vunpack.c.h.b16 %v70
    %v126 = vunpack.c.l.b16 %v71
    %v127 = vunpack.c.h.b16 %v71
    %v128 = vunpack.c.l.b16 %v72
    %v129 = vunpack.c.h.b16 %v72
    %v130 = vunpack.c.l.b16 %v73
    %v131 = vunpack.c.h.b16 %v73
    %v132 = vunpack.c.l.b16 %v74
    %v133 = vunpack.c.h.b16 %v74
    %v134 = vunpack.c.l.b16 %v75
    %v135 = vunpack.c.h.b16 %v75
    %v136 = vpack.c.b16 %v106, %v104
    %v137 = vpack.c.b16 %v107, %v105
    %v138 = vpack.c.b16 %v110, %v108
    %v139 = vpack.c.b16 %v111, %v109
    %v140 = vpack.c.b16 %v114, %v112
    %v141 = vpack.c.b16 %v115, %v113
    %v142 = vpack.c.b16 %v118, %v116
    %v143 = vpack.c.b16 %v119, %v117
    %v144 = vpack.c.b16 %v122, %v120
    %v145 = vpack.c.b16 %v123, %v121
    %v146 = vpack.c.b16 %v126, %v124
    %v147 = vpack.c.b16 %v127, %v125
    %v148 = vpack.c.b16 %v130, %v128
    %v149 = vpack.c.b16 %v131, %v129
    %v150 = vpack.c.b16 %v134, %v132
    %v151 = vpack.c.b16 %v135, %v133
    %168 = vmatprep.subr.bf16.mxu0 %v137
    %169 = vmatpush1.bf16.msra.mxu0 %v136
    %170 = vmatprep.subr.bf16.mxu0 %v139
    %171 = vmatpush1.bf16.msra.mxu0 %v138
    %172 = vmatprep.subr.bf16.mxu0 %v141
    %173 = vmatpush1.bf16.msra.mxu0 %v140
    %174 = vmatprep.subr.bf16.mxu0 %v143
    %175 = vmatpush1.bf16.msra.mxu0 %v142
    %176 = vmatprep.subr.bf16.mxu0 %v145
    %177 = vmatpush1.bf16.msra.mxu0 %v144
    %178 = vmatprep.subr.bf16.mxu0 %v147
    %179 = vmatpush1.bf16.msra.mxu0 %v146
    %180 = vmatprep.subr.bf16.mxu0 %v149
    %181 = vmatpush1.bf16.msra.mxu0 %v148
    %182 = vmatprep.subr.bf16.mxu0 %v151
    %183 = vmatpush1.bf16.msra.mxu0 %v150
    %184 = vmatprep.subr.bf16.mxu0 0
    %185 = vmatpush1.bf16.msra.mxu0 0
    %186 = vmatprep.subr.bf16.mxu0 0
    %187 = vmatpush1.bf16.msra.mxu0 0
    %188 = vmatprep.subr.bf16.mxu0 0
    %189 = vmatpush1.bf16.msra.mxu0 0
    %190 = vmatprep.subr.bf16.mxu0 0
    %191 = vmatpush1.bf16.msra.mxu0 0
    %192 = vmatprep.subr.bf16.mxu0 0
    %193 = vmatpush1.bf16.msra.mxu0 0
    %194 = vmatprep.subr.bf16.mxu0 0
    %195 = vmatpush1.bf16.msra.mxu0 0
    %196 = vmatprep.subr.bf16.mxu0 0
    %197 = vmatpush1.bf16.msra.mxu0 0
    %198 = vmatprep.subr.bf16.mxu0 0
    %199 = vmatpush1.bf16.msra.mxu0 0
    %200 = vmatprep.mubr.bf16.mxu0 0
    %201 = vmatmul.mubr.bf16.gmra.mrb[0].mxu0 %v59
    %v202 = vpop.f32.mrb[0].mxu0
    %v203 = vadd.f32 %v81, %v202
    %v204 = vpop.f32.mrb[0].mxu0
    %v205 = vadd.f32 %v85, %v204
    %v206 = vpop.f32.mrb[0].mxu0
    %v207 = vpop.f32.mrb[0].mxu0
    %208 = vdwg.mxu0
    %v209 = vmax.f32 %v203, 0.0
    %v210 = vmax.f32 %v205, 0.0
    %v211 = vpack.c.bf16 %v209, %v209
    %v212 = vpack.c.bf16 %v210, %v210
    %v213 = vld [vmem:[%s5] sm:$0xf]
    %v214 = vld [vmem:[%s5 + $0x4] sm:$0xf]
    %v215 = vld [vmem:[%s5 + $0x8] sm:$0xf]
    %v216 = vld [vmem:[%s5 + $0xc] sm:$0xf]
    %v217 = vld [vmem:[%s5 + $0x10] sm:$0xf]
    %v218 = vld [vmem:[%s5 + $0x14] sm:$0xf]
    %v219 = vld [vmem:[%s5 + $0x18] sm:$0xf]
    %v220 = vld [vmem:[%s5 + $0x1c] sm:$0xf]
    %v221 = vld [vmem:[%s5 + $0x20] sm:$0xf]
    %v222 = vld [vmem:[%s5 + $0x24] sm:$0xf]
    %v223 = vld [vmem:[%s5 + $0x28] sm:$0xf]
    %v224 = vld [vmem:[%s5 + $0x2c] sm:$0xf]
    %v225 = vld [vmem:[%s5 + $0x30] sm:$0xf]
    %v226 = vld [vmem:[%s5 + $0x34] sm:$0xf]
    %v227 = vld [vmem:[%s5 + $0x38] sm:$0xf]
    %v228 = vld [vmem:[%s5 + $0x3c] sm:$0xf]
    %v229 = vld [vmem:[%s5 + $0x40] sm:$0xf]
    %v230 = vld [vmem:[%s5 + $0x44] sm:$0xf]
    %v231 = vld [vmem:[%s5 + $0x48] sm:$0xf]
    %v232 = vld [vmem:[%s5 + $0x4c] sm:$0xf]
    %v233 = vld [vmem:[%s5 + $0x50] sm:$0xf]
    %v234 = vld [vmem:[%s5 + $0x54] sm:$0xf]
    %v235 = vld [vmem:[%s5 + $0x58] sm:$0xf]
    %v236 = vld [vmem:[%s5 + $0x5c] sm:$0xf]
    %v237 = vld [vmem:[%s5 + $0x60] sm:$0xf]
    %v238 = vld [vmem:[%s5 + $0x64] sm:$0xf]
    %v239 = vld [vmem:[%s5 + $0x68] sm:$0xf]
    %v240 = vld [vmem:[%s5 + $0x6c] sm:$0xf]
    %v241 = vld [vmem:[%s5 + $0x70] sm:$0xf]
    %v242 = vld [vmem:[%s5 + $0x74] sm:$0xf]
    %v243 = vld [vmem:[%s5 + $0x78] sm:$0xf]
    %v244 = vld [vmem:[%s5 + $0x7c] sm:$0xf]
    %v245 = vld [vmem:[%s6] sm:$0x1]
    %v247 = vlaneseq
    %v248 = vshrl.u32 %v247, 7
    %v249 = vsub.s32 0, %v248
    %v250 = vrot.slane %v245, %v249
    %v284 = vunpack.c.l.b16 %v213
    %v285 = vunpack.c.l.b16 %v214
    %v286 = vunpack.c.l.b16 %v215
    %v287 = vunpack.c.l.b16 %v216
    %v288 = vunpack.c.l.b16 %v217
    %v289 = vunpack.c.l.b16 %v218
    %v290 = vunpack.c.l.b16 %v219
    %v291 = vunpack.c.l.b16 %v220
    %v292 = vunpack.c.l.b16 %v221
    %v293 = vunpack.c.l.b16 %v222
    %v294 = vunpack.c.l.b16 %v223
    %v295 = vunpack.c.l.b16 %v224
    %v296 = vunpack.c.l.b16 %v225
    %v297 = vunpack.c.l.b16 %v226
    %v298 = vunpack.c.l.b16 %v227
    %v299 = vunpack.c.l.b16 %v228
    %v300 = vunpack.c.l.b16 %v229
    %v301 = vunpack.c.l.b16 %v230
    %v302 = vunpack.c.l.b16 %v231
    %v303 = vunpack.c.l.b16 %v232
    %v304 = vunpack.c.l.b16 %v233
    %v305 = vunpack.c.l.b16 %v234
    %v306 = vunpack.c.l.b16 %v235
    %v307 = vunpack.c.l.b16 %v236
    %v308 = vunpack.c.l.b16 %v237
    %v309 = vunpack.c.l.b16 %v238
    %v310 = vunpack.c.l.b16 %v239
    %v311 = vunpack.c.l.b16 %v240
    %v312 = vunpack.c.l.b16 %v241
    %v313 = vunpack.c.l.b16 %v242
    %v314 = vunpack.c.l.b16 %v243
    %v315 = vunpack.c.l.b16 %v244
    %v316 = vpack.c.b16 %v285, %v284
    %v317 = vpack.c.b16 %v287, %v286
    %v318 = vpack.c.b16 %v289, %v288
    %v319 = vpack.c.b16 %v291, %v290
    %v320 = vpack.c.b16 %v293, %v292
    %v321 = vpack.c.b16 %v295, %v294
    %v322 = vpack.c.b16 %v297, %v296
    %v323 = vpack.c.b16 %v299, %v298
    %v324 = vpack.c.b16 %v301, %v300
    %v325 = vpack.c.b16 %v303, %v302
    %v326 = vpack.c.b16 %v305, %v304
    %v327 = vpack.c.b16 %v307, %v306
    %v328 = vpack.c.b16 %v309, %v308
    %v329 = vpack.c.b16 %v311, %v310
    %v330 = vpack.c.b16 %v313, %v312
    %v331 = vpack.c.b16 %v315, %v314
    %348 = vmatprep.subr.bf16.mxu0 0
    %349 = vmatpush1.bf16.msra.mxu0 %v316
    %350 = vmatprep.subr.bf16.mxu0 0
    %351 = vmatpush1.bf16.msra.mxu0 %v317
    %352 = vmatprep.subr.bf16.mxu0 0
    %353 = vmatpush1.bf16.msra.mxu0 %v318
    %354 = vmatprep.subr.bf16.mxu0 0
    %355 = vmatpush1.bf16.msra.mxu0 %v319
    %356 = vmatprep.subr.bf16.mxu0 0
    %357 = vmatpush1.bf16.msra.mxu0 %v320
    %358 = vmatprep.subr.bf16.mxu0 0
    %359 = vmatpush1.bf16.msra.mxu0 %v321
    %360 = vmatprep.subr.bf16.mxu0 0
    %361 = vmatpush1.bf16.msra.mxu0 %v322
    %362 = vmatprep.subr.bf16.mxu0 0
    %363 = vmatpush1.bf16.msra.mxu0 %v323
    %364 = vmatprep.subr.bf16.mxu0 0
    %365 = vmatpush1.bf16.msra.mxu0 %v324
    %366 = vmatprep.subr.bf16.mxu0 0
    %367 = vmatpush1.bf16.msra.mxu0 %v325
    %368 = vmatprep.subr.bf16.mxu0 0
    %369 = vmatpush1.bf16.msra.mxu0 %v326
    %370 = vmatprep.subr.bf16.mxu0 0
    %371 = vmatpush1.bf16.msra.mxu0 %v327
    %372 = vmatprep.subr.bf16.mxu0 0
    %373 = vmatpush1.bf16.msra.mxu0 %v328
    %374 = vmatprep.subr.bf16.mxu0 0
    %375 = vmatpush1.bf16.msra.mxu0 %v329
    %376 = vmatprep.subr.bf16.mxu0 0
    %377 = vmatpush1.bf16.msra.mxu0 %v330
    %378 = vmatprep.subr.bf16.mxu0 0
    %379 = vmatpush1.bf16.msra.mxu0 %v331
    %380 = vmatprep.mubr.bf16.mxu0 %v212
    %381 = vmatmul.mubr.bf16.gmra.mrb[0].mxu0 %v211
    %v382 = vpop.f32.mrb[0].mxu0
    %v383 = vadd.f32 %v250, %v382
    %v384 = vpop.f32.mrb[0].mxu0
    %v385 = vpop.f32.mrb[0].mxu0
    %v386 = vpop.f32.mrb[0].mxu0
    %387 = vdwg.mxu0
    %v388 = vmax.f32 %v383, 0.0
    %v389 = vld [vmem:[%s7] sm:$0x1]
    %v390 = vld [vmem:[#allocation2] sm:$0x1]
    %392 = vset.pattern.permute.xlu0 0
    %393 = vperm.xlu0 %392, %v390
    %v394 = vpop.permute.xlu0 %393
    %v396 = vlaneseq
    %v397 = vshrl.u32 %v396, 7
    %v398 = vsub.s32 0, %v397
    %v399 = vrot.slane %v394, %v398
    %400 = vmatprep.subr.mxu0 0.0
    %401 = vmatpush1.xpose.msra.mxu0 %v388
    %402 = vmatprep.subr.mxu0 0.0
    %403 = vmatpush1.xpose.msra.mxu0 0.0
    %404 = vmatprep.subr.mxu0 0.0
    %405 = vmatpush1.xpose.msra.mxu0 0.0
    %406 = vmatprep.subr.mxu0 0.0
    %407 = vmatpush1.xpose.msra.mxu0 0.0
    %408 = vmatprep.subr.mxu0 0.0
    %409 = vmatpush1.xpose.msra.mxu0 0.0
    %410 = vmatprep.subr.mxu0 0.0
    %411 = vmatpush1.xpose.msra.mxu0 0.0
    %412 = vmatprep.subr.mxu0 0.0
    %413 = vmatpush1.xpose.msra.mxu0 0.0
    %414 = vmatprep.subr.mxu0 0.0
    %415 = vmatpush1.xpose.msra.mxu0 0.0
    %416 = vmatprep.subr.mxu0 0.0
    %417 = vmatpush1.xpose.msra.mxu0 0.0
    %418 = vmatprep.subr.mxu0 0.0
    %419 = vmatpush1.xpose.msra.mxu0 0.0
    %420 = vmatprep.subr.mxu0 0.0
    %421 = vmatpush1.xpose.msra.mxu0 0.0
    %422 = vmatprep.subr.mxu0 0.0
    %423 = vmatpush1.xpose.msra.mxu0 0.0
    %424 = vmatprep.subr.mxu0 0.0
    %425 = vmatpush1.xpose.msra.mxu0 0.0
    %426 = vmatprep.subr.mxu0 0.0
    %427 = vmatpush1.xpose.msra.mxu0 0.0
    %428 = vmatprep.subr.mxu0 0.0
    %429 = vmatpush1.xpose.msra.mxu0 0.0
    %430 = vmatprep.subr.mxu0 0.0
    %431 = vmatpush1.xpose.msra.mxu0 0.0
    %432 = vmatprep.subr.mxu0 0.0
    %433 = vmatpush1.xpose.msra.mxu0 0.0
    %434 = vmatprep.subr.mxu0 0.0
    %435 = vmatpush1.xpose.msra.mxu0 0.0
    %436 = vmatprep.subr.mxu0 0.0
    %437 = vmatpush1.xpose.msra.mxu0 0.0
    %438 = vmatprep.subr.mxu0 0.0
    %439 = vmatpush1.xpose.msra.mxu0 0.0
    %440 = vmatprep.subr.mxu0 0.0
    %441 = vmatpush1.xpose.msra.mxu0 0.0
    %442 = vmatprep.subr.mxu0 0.0
    %443 = vmatpush1.xpose.msra.mxu0 0.0
    %444 = vmatprep.subr.mxu0 0.0
    %445 = vmatpush1.xpose.msra.mxu0 0.0
    %446 = vmatprep.subr.mxu0 0.0
    %447 = vmatpush1.xpose.msra.mxu0 0.0
    %448 = vmatprep.subr.mxu0 0.0
    %449 = vmatpush1.xpose.msra.mxu0 0.0
    %450 = vmatprep.subr.mxu0 0.0
    %451 = vmatpush1.xpose.msra.mxu0 0.0
    %452 = vmatprep.subr.mxu0 0.0
    %453 = vmatpush1.xpose.msra.mxu0 0.0
    %454 = vmatprep.subr.mxu0 0.0
    %455 = vmatpush1.xpose.msra.mxu0 0.0
    %456 = vmatprep.subr.mxu0 0.0
    %457 = vmatpush1.xpose.msra.mxu0 0.0
    %458 = vmatprep.subr.mxu0 0.0
    %459 = vmatpush1.xpose.msra.mxu0 0.0
    %460 = vmatprep.subr.mxu0 0.0
    %461 = vmatpush1.xpose.msra.mxu0 0.0
    %462 = vmatprep.subr.mxu0 0.0
    %463 = vmatpush1.xpose.msra.mxu0 0.0
    %464 = vmatprep.mubr.f32.mxu0 0.0
    %465 = vmatmul.mubr.f32.gmra.mrb[0].mxu0 %v389
    %v466 = vpop.f32.mrb[0].mxu0
    %v467 = vadd.f32 %v399, %v466
    %v468 = vpop.f32.mrb[0].mxu0
    %469 = vdwg.mxu0
    %v470 = vxor.u32 %v467, 2147483648
    %v471 = vmul.f32 %v470, 1.442695
    %v472 = vpow.pop %v471
    %v473 = vadd.f32 %v472, 1.0
    %v474 = vrcp.pop %v473
    %v475 = vmul.f32 1.0, %v474
    %vm476 = vcmask 57344
    %477 = vst.msk [vmem:[#allocation3] sm:$0x1] %vm476, %v475
    // Predicated region
    $region38: #{mlp_widen_forward.1} parent=1 // pred_check
      _
    $region39: #{mlp_widen_forward.1} parent=1 // pred_check_branch
      %479 = sbr.rel (0) target = $region41
    $region40: #{mlp_widen_forward.1} parent=1 // pred_region
      %s481 = ssub.s32 16, 16
      %482 = vsyncadd [#allocation4], %s481
      %s484 = sshll.u32 [#allocation3], 4
      %s485 = int_to_ptr.vmem [resolvable:$true] %s484
      %487 = dma.vmem_to_hbm [thread:$0]  %s485, 16, %s9, [#allocation4]
    $region41: #{mlp_widen_forward.1} parent=1 // pred_fallthru
      _
    // Predicated region
    $region42: #{mlp_widen_forward.1} parent=1 // pred_check
      _
    $region43: #{mlp_widen_forward.1} parent=1 // pred_check_branch
      %489 = sbr.rel (0) target = $region45
    $region44: #{mlp_widen_forward.1} parent=1 // pred_region
      %490 = dma.done [#allocation4], 16
    $region45: #{mlp_widen_forward.1} parent=1 // pred_fallthru
      _
    %491 = vsyncpa [#allocation4], 1

</llo_original>
